<compile_context>
chip_gen: v7x
topology: tpu7x:2x2x1
jax: 0.10.0
libtpu: 0.0.40
codegen_flags: <defaults>
</compile_context>

<pallas_src>
import jax
import jax.numpy as jnp
from jax.experimental import pallas as pl
from jax.experimental.pallas import tpu as pltpu

B = 4           # batch size fixed by the module
LANES = 128     # lane-dense output slab width

# Lane offsets inside the packed output slab.
_O4, _O5, _O6, _O7, _O8 = 0, 4, 8, 12, 16   # v4..v7: 4 lanes each; v8: 10 lanes
_OUT_USED = 26


def fused_bmm_kernel(v1_ref, v2_ref, x2_ref, out_ref):
    # Each input keeps batch on the sublane axis and the two matrix rows
    # flattened along lanes:  (B, 2, k) -> (B, 2*k).
    v1 = v1_ref[...]    # (4, 6)
    v2 = v2_ref[...]    # (4, 10)
    x2 = x2_ref[...]    # (4, 4)

    A0, A1 = v1[:, 0:3], v1[:, 3:6]       # v1 rows per batch
    B0, B1 = v2[:, 0:5], v2[:, 5:10]      # v2 rows per batch

    def rowdot(u, w):
        # Per-batch dot product; lane reduction lands in the idle XLU slot.
        return jnp.sum(u * w, axis=1, keepdims=True)         # (4, 1)

    # v4 ~ bmm(v1, v1) as v1 @ v1^T : symmetric 2x2 Gram per batch.
    a00, a01, a11 = rowdot(A0, A0), rowdot(A0, A1), rowdot(A1, A1)
    v4 = jnp.concatenate([a00, a01, a01, a11], axis=1)        # (4,4) == (B,2,2)

    # v5 = matmul(x2, x2) : per-batch (2x2)@(2x2).
    x00, x01, x10, x11 = x2[:, 0:1], x2[:, 1:2], x2[:, 2:3], x2[:, 3:4]
    v5 = jnp.concatenate([x00 * x00 + x01 * x10,
                          x00 * x01 + x01 * x11,
                          x10 * x00 + x11 * x10,
                          x10 * x01 + x11 * x11], axis=1)     # (4, 4)

    # v6 ~ bmm(v2, v2) as v2 @ v2^T.
    g00, g01, g11 = rowdot(B0, B0), rowdot(B0, B1), rowdot(B1, B1)
    v6 = jnp.concatenate([g00, g01, g01, g11], axis=1)        # (4, 4)

    # v7 = matmul(v6, v6) : per-batch (2x2)@(2x2) with symmetric v6.
    v7 = jnp.concatenate([g00 * g00 + g01 * g01,
                          g00 * g01 + g01 * g11,
                          g01 * g00 + g11 * g01,
                          g01 * g01 + g11 * g11], axis=1)     # (4, 4)

    # v8 = bmm(v4, v2) : per-batch (2x2)@(2x5).
    r0 = a00 * B0 + a01 * B1                                  # (4, 5)
    r1 = a01 * B0 + a11 * B1                                  # (4, 5)
    v8 = jnp.concatenate([r0, r1], axis=1)                    # (4, 10)

    # One lane-dense slab, one unmasked store.
    pad = jnp.zeros((B, LANES - _OUT_USED), jnp.float32)
    out_ref[...] = jnp.concatenate([v4, v5, v6, v7, v8, pad], axis=1)


@jax.jit
def model_forward(x1, x2, key):
    # x1 is accepted but unused, exactly as in the PyTorch module.
    del x1
    k1, k2, k3 = jax.random.split(key, 3)
    v1 = jax.random.normal(k1, (B, 2, 3), dtype=jnp.float32)
    v2 = jax.random.normal(k2, (B, 2, 5), dtype=jnp.float32)
    v3 = jax.random.normal(k3, (B, 2, 5), dtype=jnp.float32)

    out = pl.pallas_call(
        fused_bmm_kernel,
        out_shape=jax.ShapeDtypeStruct((B, LANES), jnp.float32),
        in_specs=[pl.BlockSpec(memory_space=pltpu.MemorySpace.VMEM)] * 3,
        out_specs=pl.BlockSpec(memory_space=pltpu.MemorySpace.VMEM),
        cost_estimate=pl.CostEstimate(
            flops=512, transcendentals=0, bytes_accessed=2432),
    )(v1.reshape(B, 6), v2.reshape(B, 10), x2.reshape(B, 4))

    v4 = out[:, _O4:_O4 + 4].reshape(B, 2, 2)
    v5 = out[:, _O5:_O5 + 4].reshape(B, 2, 2)
    v6 = out[:, _O6:_O6 + 4].reshape(B, 2, 2)
    v7 = out[:, _O7:_O7 + 4].reshape(B, 2, 2)
    v8 = out[:, _O8:_O8 + 10].reshape(B, 2, 5)

    return (v1, v2, v3, v4, v5, v6, v7, v8)


if __name__ == "__main__":
    key = jax.random.PRNGKey(0)
    k_x1, k_x2, k_model = jax.random.split(key, 3)

    x1 = jax.random.normal(k_x1, (B, 2, 2), dtype=jnp.float32)  # unused
    x2 = jax.random.normal(k_x2, (B, 2, 2), dtype=jnp.float32)

    outs = model_forward(x1, x2, k_model)
    outs = jax.block_until_ready(outs)
    v1, v2, v3, v4, v5, v6, v7, v8 = outs

    # Pure-JAX reference check (same A @ A^T reinterpretation, documented above)
    r4 = jnp.einsum("bik,bjk->bij", v1, v1)
    r5 = jnp.einsum("bik,bkj->bij", x2, x2)
    r6 = jnp.einsum("bik,bjk->bij", v2, v2)
    r7 = jnp.einsum("bik,bkj->bij", r6, r6)
    r8 = jnp.einsum("bik,bkj->bij", r4, v2)
    for got, ref in ((v4, r4), (v5, r5), (v6, r6), (v7, r7), (v8, r8)):
        assert jnp.allclose(got, ref, atol=1e-5, rtol=1e-5), "mismatch vs reference"

    print("KERNEL_OK")
</pallas_src>

<mosaic_0001>
module attributes {stable_mosaic.version = 11 : i64} {
  func.func @fused_bmm_kernel(%arg0: memref<4x6xf32, #tpu.memory_space<vmem>>, %arg1: memref<4x10xf32, #tpu.memory_space<vmem>>, %arg2: memref<4x4xf32, #tpu.memory_space<vmem>>, %arg3: memref<4x128xf32, #tpu.memory_space<vmem>>) attributes {dimension_semantics = [], scalar_prefetch = 0 : i64, scratch_operands = 0 : i64, tpu.core_type = #tpu.core_type<tc>} {
    %c0 = arith.constant 0 : index
    %c0_0 = arith.constant 0 : index
    %0 = vector.load %arg0[%c0, %c0_0] : memref<4x6xf32, #tpu.memory_space<vmem>>, vector<4x6xf32>
    %c0_1 = arith.constant 0 : index
    %c0_2 = arith.constant 0 : index
    %1 = vector.load %arg1[%c0_1, %c0_2] : memref<4x10xf32, #tpu.memory_space<vmem>>, vector<4x10xf32>
    %c0_3 = arith.constant 0 : index
    %c0_4 = arith.constant 0 : index
    %2 = vector.load %arg2[%c0_3, %c0_4] : memref<4x4xf32, #tpu.memory_space<vmem>>, vector<4x4xf32>
    %3 = vector.extract_strided_slice %0 {offsets = [0, 0], sizes = [4, 3], strides = [1, 1]} : vector<4x6xf32> to vector<4x3xf32>
    %4 = vector.extract_strided_slice %0 {offsets = [0, 3], sizes = [4, 3], strides = [1, 1]} : vector<4x6xf32> to vector<4x3xf32>
    %5 = vector.extract_strided_slice %1 {offsets = [0, 0], sizes = [4, 5], strides = [1, 1]} : vector<4x10xf32> to vector<4x5xf32>
    %6 = vector.extract_strided_slice %1 {offsets = [0, 5], sizes = [4, 5], strides = [1, 1]} : vector<4x10xf32> to vector<4x5xf32>
    %7 = arith.mulf %3, %3 : vector<4x3xf32>
    %cst = arith.constant dense<0.000000e+00> : vector<4xf32>
    %8 = vector.multi_reduction <add>, %7, %cst [1] : vector<4x3xf32> to vector<4xf32>
    %9 = vector.shape_cast %8 : vector<4xf32> to vector<4x1xf32>
    %10 = arith.mulf %3, %4 : vector<4x3xf32>
    %cst_5 = arith.constant dense<0.000000e+00> : vector<4xf32>
    %11 = vector.multi_reduction <add>, %10, %cst_5 [1] : vector<4x3xf32> to vector<4xf32>
    %12 = vector.shape_cast %11 : vector<4xf32> to vector<4x1xf32>
    %13 = arith.mulf %4, %4 : vector<4x3xf32>
    %cst_6 = arith.constant dense<0.000000e+00> : vector<4xf32>
    %14 = vector.multi_reduction <add>, %13, %cst_6 [1] : vector<4x3xf32> to vector<4xf32>
    %15 = vector.shape_cast %14 : vector<4xf32> to vector<4x1xf32>
    %16 = tpu.concatenate %9, %12, %12, %15 in 1 : vector<4x1xf32>, vector<4x1xf32>, vector<4x1xf32>, vector<4x1xf32> -> vector<4x4xf32>
    %17 = vector.extract_strided_slice %2 {offsets = [0, 0], sizes = [4, 1], strides = [1, 1]} : vector<4x4xf32> to vector<4x1xf32>
    %18 = vector.extract_strided_slice %2 {offsets = [0, 1], sizes = [4, 1], strides = [1, 1]} : vector<4x4xf32> to vector<4x1xf32>
    %19 = vector.extract_strided_slice %2 {offsets = [0, 2], sizes = [4, 1], strides = [1, 1]} : vector<4x4xf32> to vector<4x1xf32>
    %20 = vector.extract_strided_slice %2 {offsets = [0, 3], sizes = [4, 1], strides = [1, 1]} : vector<4x4xf32> to vector<4x1xf32>
    %21 = arith.mulf %17, %17 : vector<4x1xf32>
    %22 = arith.mulf %18, %19 : vector<4x1xf32>
    %23 = arith.addf %21, %22 : vector<4x1xf32>
    %24 = arith.mulf %17, %18 : vector<4x1xf32>
    %25 = arith.mulf %18, %20 : vector<4x1xf32>
    %26 = arith.addf %24, %25 : vector<4x1xf32>
    %27 = arith.mulf %19, %17 : vector<4x1xf32>
    %28 = arith.mulf %20, %19 : vector<4x1xf32>
    %29 = arith.addf %27, %28 : vector<4x1xf32>
    %30 = arith.mulf %19, %18 : vector<4x1xf32>
    %31 = arith.mulf %20, %20 : vector<4x1xf32>
    %32 = arith.addf %30, %31 : vector<4x1xf32>
    %33 = tpu.concatenate %23, %26, %29, %32 in 1 : vector<4x1xf32>, vector<4x1xf32>, vector<4x1xf32>, vector<4x1xf32> -> vector<4x4xf32>
    %34 = arith.mulf %5, %5 : vector<4x5xf32>
    %cst_7 = arith.constant dense<0.000000e+00> : vector<4xf32>
    %35 = vector.multi_reduction <add>, %34, %cst_7 [1] : vector<4x5xf32> to vector<4xf32>
    %36 = vector.shape_cast %35 : vector<4xf32> to vector<4x1xf32>
    %37 = arith.mulf %5, %6 : vector<4x5xf32>
    %cst_8 = arith.constant dense<0.000000e+00> : vector<4xf32>
    %38 = vector.multi_reduction <add>, %37, %cst_8 [1] : vector<4x5xf32> to vector<4xf32>
    %39 = vector.shape_cast %38 : vector<4xf32> to vector<4x1xf32>
    %40 = arith.mulf %6, %6 : vector<4x5xf32>
    %cst_9 = arith.constant dense<0.000000e+00> : vector<4xf32>
    %41 = vector.multi_reduction <add>, %40, %cst_9 [1] : vector<4x5xf32> to vector<4xf32>
    %42 = vector.shape_cast %41 : vector<4xf32> to vector<4x1xf32>
    %43 = tpu.concatenate %36, %39, %39, %42 in 1 : vector<4x1xf32>, vector<4x1xf32>, vector<4x1xf32>, vector<4x1xf32> -> vector<4x4xf32>
    %44 = arith.mulf %36, %36 : vector<4x1xf32>
    %45 = arith.mulf %39, %39 : vector<4x1xf32>
    %46 = arith.addf %44, %45 : vector<4x1xf32>
    %47 = arith.mulf %36, %39 : vector<4x1xf32>
    %48 = arith.mulf %39, %42 : vector<4x1xf32>
    %49 = arith.addf %47, %48 : vector<4x1xf32>
    %50 = arith.mulf %39, %36 : vector<4x1xf32>
    %51 = arith.mulf %42, %39 : vector<4x1xf32>
    %52 = arith.addf %50, %51 : vector<4x1xf32>
    %53 = arith.mulf %39, %39 : vector<4x1xf32>
    %54 = arith.mulf %42, %42 : vector<4x1xf32>
    %55 = arith.addf %53, %54 : vector<4x1xf32>
    %56 = tpu.concatenate %46, %49, %52, %55 in 1 : vector<4x1xf32>, vector<4x1xf32>, vector<4x1xf32>, vector<4x1xf32> -> vector<4x4xf32>
    %57 = vector.broadcast %9 : vector<4x1xf32> to vector<4x5xf32>
    %58 = arith.mulf %57, %5 : vector<4x5xf32>
    %59 = vector.broadcast %12 : vector<4x1xf32> to vector<4x5xf32>
    %60 = arith.mulf %59, %6 : vector<4x5xf32>
    %61 = arith.addf %58, %60 : vector<4x5xf32>
    %62 = vector.broadcast %12 : vector<4x1xf32> to vector<4x5xf32>
    %63 = arith.mulf %62, %5 : vector<4x5xf32>
    %64 = vector.broadcast %15 : vector<4x1xf32> to vector<4x5xf32>
    %65 = arith.mulf %64, %6 : vector<4x5xf32>
    %66 = arith.addf %63, %65 : vector<4x5xf32>
    %67 = tpu.concatenate %61, %66 in 1 : vector<4x5xf32>, vector<4x5xf32> -> vector<4x10xf32>
    %cst_10 = arith.constant 0.000000e+00 : f32
    %68 = vector.broadcast %cst_10 : f32 to vector<4x102xf32>
    %69 = tpu.concatenate %16, %33, %43, %56, %67, %68 in 1 : vector<4x4xf32>, vector<4x4xf32>, vector<4x4xf32>, vector<4x4xf32>, vector<4x10xf32>, vector<4x102xf32> -> vector<4x128xf32>
    %c0_11 = arith.constant 0 : index
    %c0_12 = arith.constant 0 : index
    %70 = vector.load %arg3[%c0_11, %c0_12] : memref<4x128xf32, #tpu.memory_space<vmem>>, vector<4x128xf32>
    tpu.vector_store %arg3[%c0_11, %c0_12], %69 {strides = array<i32>} : memref<4x128xf32, #tpu.memory_space<vmem>>, vector<4x128xf32>,
    return
  }
}

</mosaic_0001>

<llo_original>
// kernel: model_forward.3
$region0: #{model_forward.3}
  #allocation0 [shape = 'u32[]', space=smem, size = 0x4, offset = 0x4, fixed_abs, tag = 'smem constant byte address 0x4 - core index']
  #allocation1 [shape = 'u32[144,128]{1,0:T(1,128)}', space=vmem, size = 0x12000, scoped, tag = 'internal scratch']
  %s0 = inlined_call_operand.vmem [shape: f32[4,6], index: 0, kind: input, shape index: {}]
  %s1 = inlined_call_operand.vmem [shape: f32[4,10], index: 1, kind: input, shape index: {}]
  %s2 = inlined_call_operand.vmem [shape: f32[4,4], index: 2, kind: input, shape index: {}]
  %s3 = inlined_call_operand.vmem [shape: f32[4,128], index: 3, kind: output, shape index: {}]
  %s4 = sld [smem:[#allocation0]]
  $region22: #{model_forward.3} parent=0
    _
  %s6 = ssub.s32 1, %s4
  %s7 = scalar_select 0, %s6, %s4
  // Predicated region
  $region2: #{model_forward.3} parent=0 // pred_check
    _
  $region3: #{model_forward.3} parent=0 // pred_check_branch
    %9 = sbr.rel (0) target = $region5
  $region4: #{model_forward.3} parent=0 // pred_region
    _
  $region5: #{model_forward.3} parent=0 // pred_fallthru
    _
  // Predicated region
  $region6: #{model_forward.3} parent=0 // pred_check
    _
  $region7: #{model_forward.3} parent=0 // pred_check_branch
    %11 = sbr.rel (0) target = $region9
  $region8: #{model_forward.3} parent=0 // pred_region
    _
  $region9: #{model_forward.3} parent=0 // pred_fallthru
    _
  // Predicated region
  $region10: #{model_forward.3} parent=0 // pred_check
    _
  $region11: #{model_forward.3} parent=0 // pred_check_branch
    %13 = sbr.rel (0) target = $region13
  $region12: #{model_forward.3} parent=0 // pred_region
    _
  $region13: #{model_forward.3} parent=0 // pred_fallthru
    _
  %v14 = vld [vmem:[%s0] sm:$0xf]
  %v15 = vld [vmem:[%s1] sm:$0xf]
  %v16 = vld [vmem:[%s2] sm:$0xf]
  %v17 = vmul.f32 %v14, %v14
  %vm18 = vcmask 19456
  %v19 = vsel %vm18, %v17, 0.0
  %20 = vadd.xlane.f32.xlu0 %v19
  %v21 = vpop.xlane.xlu0 %20
  %23 = vrot.lane.b32.xlu0 %v14, 125
  %v24 = vpop.permute.xlu0 %23
  %v26 = vmul.f32 %v14, %v24
  %v27 = vsel %vm18, %v26, 0.0
  %28 = vadd.xlane.f32.xlu0 %v27
  %v29 = vpop.xlane.xlu0 %28
  %31 = vrot.lane.b32.xlu0 %v17, 125
  %v32 = vpop.permute.xlu0 %31
  %v34 = vsel %vm18, %v32, 0.0
  %35 = vadd.xlane.f32.xlu0 %v34
  %v36 = vpop.xlane.xlu0 %35
  %vm37 = vcmask 7168
  %v38 = vsel %vm37, %v21, %v29
  %vm39 = vcmask 15360
  %v40 = vsel %vm39, %v38, %v29
  %vm41 = vcmask 23552
  %v42 = vsel %vm41, %v40, %v36
  %v43 = vmul.f32 %v16, %v16
  %45 = vrot.lane.b32.xlu0 %v16, 127
  %v46 = vpop.permute.xlu0 %45
  %v48 = vmul.f32 %v16, %v46
  %50 = vrot.lane.b32.xlu0 %v48, 127
  %v51 = vpop.permute.xlu0 %50
  %v53 = vadd.f32 %v43, %v51
  %54 = vrot.lane.b32.xlu0 %v16, 126
  %v55 = vpop.permute.xlu0 %54
  %v57 = vmul.f32 %v16, %v55
  %59 = vrot.lane.b32.xlu0 %v57, 127
  %v60 = vpop.permute.xlu0 %59
  %v62 = vadd.f32 %v48, %v60
  %63 = vrot.lane.b32.xlu0 %v16, 2
  %v64 = vpop.permute.xlu0 %63
  %v66 = vmul.f32 %v16, %v64
  %67 = vrot.lane.b32.xlu0 %v16, 1
  %v68 = vpop.permute.xlu0 %67
  %v70 = vmul.f32 %v16, %v68
  %72 = vrot.lane.b32.xlu0 %v70, 127
  %v73 = vpop.permute.xlu0 %72
  %v75 = vadd.f32 %v66, %v73
  %77 = vrot.lane.b32.xlu0 %v43, 126
  %v78 = vpop.permute.xlu0 %77
  %v80 = vadd.f32 %v48, %v78
  %82 = vrot.lane.b32.xlu0 %v62, 1
  %v83 = vpop.permute.xlu0 %82
  %86 = vrot.lane.b32.xlu0 %v80, 2
  %v87 = vpop.permute.xlu0 %86
  %v89 = vsel %vm37, %v53, %v83
  %v90 = vsel %vm39, %v89, %v75
  %v91 = vsel %vm41, %v90, %v87
  %v92 = vmul.f32 %v15, %v15
  %vm93 = vcmask 35840
  %v94 = vsel %vm93, %v92, 0.0
  %95 = vadd.xlane.f32.xlu0 %v94
  %v96 = vpop.xlane.xlu0 %95
  %98 = vrot.lane.b32.xlu0 %v15, 123
  %v99 = vpop.permute.xlu0 %98
  %v101 = vmul.f32 %v15, %v99
  %v102 = vsel %vm93, %v101, 0.0
  %103 = vadd.xlane.f32.xlu0 %v102
  %v104 = vpop.xlane.xlu0 %103
  %106 = vrot.lane.b32.xlu0 %v92, 123
  %v107 = vpop.permute.xlu0 %106
  %v109 = vsel %vm93, %v107, 0.0
  %110 = vadd.xlane.f32.xlu0 %v109
  %v111 = vpop.xlane.xlu0 %110
  %v112 = vsel %vm37, %v96, %v104
  %v113 = vsel %vm39, %v112, %v104
  %v114 = vsel %vm41, %v113, %v111
  %v115 = vmul.f32 %v96, %v96
  %v116 = vmul.f32 %v104, %v104
  %v117 = vadd.f32 %v115, %v116
  %v118 = vmul.f32 %v96, %v104
  %v119 = vmul.f32 %v104, %v111
  %v120 = vadd.f32 %v118, %v119
  %v121 = vmul.f32 %v111, %v111
  %v122 = vadd.f32 %v116, %v121
  %v123 = vsel %vm37, %v117, %v120
  %v124 = vsel %vm39, %v123, %v120
  %v125 = vsel %vm41, %v124, %v122
  %v126 = vmul.f32 %v21, %v15
  %v127 = vmul.f32 %v29, %v15
  %129 = vrot.lane.b32.xlu0 %v127, 123
  %v130 = vpop.permute.xlu0 %129
  %v132 = vadd.f32 %v126, %v130
  %v133 = vmul.f32 %v36, %v15
  %135 = vrot.lane.b32.xlu0 %v133, 123
  %v136 = vpop.permute.xlu0 %135
  %v138 = vadd.f32 %v127, %v136
  %140 = vrot.lane.b32.xlu0 %v138, 5
  %v141 = vpop.permute.xlu0 %140
  %vm143 = vcmask 39936
  %v144 = vsel %vm143, %v132, %v141
  %146 = vrot.lane.b32.xlu0 %v91, 4
  %v147 = vpop.permute.xlu0 %146
  %150 = vrot.lane.b32.xlu0 %v114, 8
  %v151 = vpop.permute.xlu0 %150
  %154 = vrot.lane.b32.xlu0 %v125, 12
  %v155 = vpop.permute.xlu0 %154
  %158 = vrot.lane.b32.xlu0 %v144, 16
  %v159 = vpop.permute.xlu0 %158
  %vm161 = vcmask 31744
  %v162 = vsel %vm161, %v42, %v147
  %vm163 = vcmask 64512
  %v164 = vsel %vm163, %v162, %v151
  %vm165 = vcmask 97280
  %v166 = vsel %vm165, %v164, %v155
  %vm167 = vcmask 130048
  %v168 = vsel %vm167, %v166, %v159
  %vm169 = vcmask 211968
  %v170 = vsel %vm169, %v168, 0.0
  %171 = vst [vmem:[%s3] sm:$0xf] %v170
  // Predicated region
  $region14: #{model_forward.3} parent=0 // pred_check
    _
  $region15: #{model_forward.3} parent=0 // pred_check_branch
    %173 = sbr.rel (0) target = $region17
  $region16: #{model_forward.3} parent=0 // pred_region
    _
  $region17: #{model_forward.3} parent=0 // pred_fallthru
    _
  // Predicated region
  $region18: #{model_forward.3} parent=0 // pred_check
    _
  $region19: #{model_forward.3} parent=0 // pred_check_branch
    %175 = sbr.rel (0) target = $region21
  $region20: #{model_forward.3} parent=0 // pred_region
    _
  $region21: #{model_forward.3} parent=0 // pred_fallthru
    _

</llo_original>
